<compile_context>
chip_gen: v5e
topology: v5e:2x2
jax: 0.10.0
libtpu: 0.0.40
codegen_flags: <defaults>
</compile_context>

<pallas_src>
import functools
import math

import jax
import jax.numpy as jnp
from jax.experimental import pallas as pl
from jax.experimental.pallas import tpu as pltpu

_EPS = 1e-5


def _ln_kernel_plain(x_ref, w_ref, b_ref, o_ref, *, inv_c):
    # x_ref: (TILE_ROWS, C); w_ref / b_ref: (1, C)
    x = x_ref[...].astype(jnp.float32)
    mu = jnp.sum(x, axis=-1, keepdims=True) * inv_c
    d = x - mu
    var = jnp.sum(d * d, axis=-1, keepdims=True) * inv_c
    inv = jax.lax.rsqrt(var + _EPS)
    w = w_ref[...].astype(jnp.float32)
    b = b_ref[...].astype(jnp.float32)
    o_ref[...] = (d * inv * w + b).astype(o_ref.dtype)


def _ln_kernel_packed(x_ref, w_ref, b_ref, m_ref, mt_ref, o_ref, *, inv_c):
    # x_ref: (TILE_ROWS, G*C)   -- G original rows packed per lane-dense row
    # m_ref: (G*C, G) block-diagonal ones; mt_ref: (G, G*C) its transpose.
    x = x_ref[...].astype(jnp.float32)
    m = m_ref[...]
    mt = mt_ref[...]
    # Per-segment sums on the MXU (idle for this mem-bound op).
    s1 = jnp.dot(x, m, preferred_element_type=jnp.float32)          # (T, G)
    mu = s1 * inv_c
    d = x - jnp.dot(mu, mt, preferred_element_type=jnp.float32)     # broadcast back
    s2 = jnp.dot(d * d, m, preferred_element_type=jnp.float32)      # (T, G)
    inv = jax.lax.rsqrt(s2 * inv_c + _EPS)
    inv_bc = jnp.dot(inv, mt, preferred_element_type=jnp.float32)   # (T, G*C)
    w = w_ref[...].astype(jnp.float32)
    b = b_ref[...].astype(jnp.float32)
    o_ref[...] = (d * inv_bc * w + b).astype(o_ref.dtype)


def _cdiv(a, b):
    return -(-a // b)


def _round_up(a, b):
    return _cdiv(a, b) * b


def _vmem_capacity_bytes():
    try:
        info = pltpu.get_tpu_info()
        cap = getattr(info, "vmem_capacity_bytes", None)
        if cap:
            return int(cap)
    except Exception:
        pass
    return 64 << 20  # conservative: safe on v7x (64 MiB VMEM per TensorCore)


def _choose_group(rows, c, max_width=512):
    """Pick G so (rows, C) -> (rows//G, G*C) is lane-dense (G*C % 128 == 0)."""
    if c >= 128 or rows <= 0:
        return 1
    g = 128 // math.gcd(c, 128)
    if g * c > max_width or rows % g != 0:
        return 1
    while rows % (2 * g) == 0 and 2 * g * c <= max_width:
        g *= 2
    return g


def withbias_layernorm(x, weight, bias, *, block_bytes=None):
    """LayerNorm over the last axis of x with affine (weight, bias).

    Matches PyTorch WithBias_LayerNorm.forward:
      mu = x.mean(-1); sigma = x.var(-1, unbiased=False)
      (x - mu) / sqrt(sigma + 1e-5) * weight + bias
    """
    orig_shape = x.shape
    c = orig_shape[-1]
    rows = 1
    for d in orig_shape[:-1]:
        rows *= d

    # ---- lane-dense packing: free contiguous reshape (G consecutive rows per packed row)
    g = _choose_group(rows, c)
    width = g * c
    packed_rows = max(1, rows // g)
    x2 = x.reshape(packed_rows, width)

    # ---- generation-aware block size / VMEM budget
    vmem_cap = _vmem_capacity_bytes()
    big_vmem = vmem_cap >= (100 << 20)       # v5e/v6e (128 MiB) vs v7x (64 MiB/TC)
    two_cores = not big_vmem                 # v7x: 2 TensorCores share the grid
    target_block_bytes = int(block_bytes) if block_bytes is not None else (
        (12 << 20) if big_vmem else (8 << 20))
    vmem_cap_limit = (96 << 20) if big_vmem else (52 << 20)
    vmem_cap_limit = min(vmem_cap_limit, max(16 << 20, vmem_cap - (12 << 20)))

    itemsize = jnp.dtype(x.dtype).itemsize
    rnd = max(8, 32 // itemsize)             # sublane packing: 8 f32 / 16 bf16 / 32 i8

    per_row_io = width * itemsize            # one buffer, one row
    # 2x double-buffered in + out at native dtype, plus ~4 full-block f32 temporaries.
    per_row_total = width * (4 * itemsize + 4 * 4)
    aux_bytes = (4 * width * g * 4) + (4 * width * itemsize) + (2 << 20)

    target_rows = max(rnd, target_block_bytes // max(1, per_row_io))
    budget_rows = max(rnd, (vmem_cap_limit - aux_bytes) // max(1, per_row_total))
    tile_rows = min(target_rows, budget_rows)
    tile_rows = max(rnd, (tile_rows // rnd) * rnd)
    tile_rows = min(tile_rows, _round_up(packed_rows, rnd))

    # v7x: keep the "parallel" grid length even so both TensorCores get equal work.
    if two_cores and packed_rows > rnd:
        while tile_rows > rnd and _cdiv(packed_rows, tile_rows) % 2 != 0:
            tile_rows -= rnd

    grid = (_cdiv(packed_rows, tile_rows),)

    vmem_limit = tile_rows * per_row_total + aux_bytes
    vmem_limit = max(16 << 20, min(int(vmem_limit), vmem_cap_limit))

    inv_c = 1.0 / float(c)

    if g > 1:
        w2 = jnp.tile(weight.reshape(-1), g).reshape(1, width)
        b2 = jnp.tile(bias.reshape(-1), g).reshape(1, width)
        seg = jnp.arange(width, dtype=jnp.int32) // c
        col = jnp.arange(g, dtype=jnp.int32)
        mat = (seg[:, None] == col[None, :]).astype(jnp.float32)   # (G*C, G)
        mat_t = mat.T                                              # (G, G*C)
        kernel = functools.partial(_ln_kernel_packed, inv_c=inv_c)
        in_specs = [
            pl.BlockSpec((tile_rows, width), lambda i: (i, 0)),
            pl.BlockSpec((1, width), lambda i: (0, 0)),
            pl.BlockSpec((1, width), lambda i: (0, 0)),
            pl.BlockSpec((width, g), lambda i: (0, 0)),
            pl.BlockSpec((g, width), lambda i: (0, 0)),
        ]
        args = (x2, w2, b2, mat, mat_t)
    else:
        w2 = weight.reshape(1, width)
        b2 = bias.reshape(1, width)
        kernel = functools.partial(_ln_kernel_plain, inv_c=inv_c)
        in_specs = [
            pl.BlockSpec((tile_rows, width), lambda i: (i, 0)),
            pl.BlockSpec((1, width), lambda i: (0, 0)),
            pl.BlockSpec((1, width), lambda i: (0, 0)),
        ]
        args = (x2, w2, b2)

    out = pl.pallas_call(
        kernel,
        out_shape=jax.ShapeDtypeStruct((packed_rows, width), x.dtype),
        grid=grid,
        in_specs=in_specs,
        out_specs=pl.BlockSpec((tile_rows, width), lambda i: (i, 0)),
        compiler_params=pltpu.CompilerParams(
            dimension_semantics=("parallel",),
            vmem_limit_bytes=vmem_limit,
        ),
    )(*args)

    return out.reshape(orig_shape)


def _reference_layernorm(x, weight, bias):
    x32 = x.astype(jnp.float32)
    mu = jnp.mean(x32, axis=-1, keepdims=True)
    var = jnp.mean((x32 - mu) ** 2, axis=-1, keepdims=True)
    return ((x32 - mu) / jnp.sqrt(var + 1e-5) * weight.astype(jnp.float32)
            + bias.astype(jnp.float32)).astype(x.dtype)


if __name__ == "__main__":
    key = jax.random.PRNGKey(0)
    k1, k2, k3, k4, k5 = jax.random.split(key, 5)

    # 1) Lane-dense packed path (C=32 -> G=16, width=512), default unit affine.
    B, N, C = 2, 64, 32
    x = jax.random.normal(k1, (B, N, C), dtype=jnp.float32)
    w = jnp.ones((C,), jnp.float32)    # nn.Parameter(torch.ones)
    b = jnp.zeros((C,), jnp.float32)   # nn.Parameter(torch.zeros)
    out = jax.block_until_ready(withbias_layernorm(x, w, b))
    ref = _reference_layernorm(x, w, b)
    assert out.shape == x.shape
    assert jnp.allclose(out, ref, atol=2e-5, rtol=1e-5)

    # 2) Unpacked fallback path (C=48, rows % G != 0), non-trivial affine,
    #    multiple grid steps with a partial boundary block.
    B2, N2, C2 = 3, 50, 48
    x2 = jax.random.normal(k2, (B2, N2, C2), dtype=jnp.float32)
    w2 = jax.random.normal(k3, (C2,), dtype=jnp.float32)
    b2 = jax.random.normal(k4, (C2,), dtype=jnp.float32)
    out2 = jax.block_until_ready(withbias_layernorm(x2, w2, b2, block_bytes=32 * C2 * 4))
    ref2 = _reference_layernorm(x2, w2, b2)
    assert out2.shape == x2.shape
    assert jnp.allclose(out2, ref2, atol=2e-5, rtol=1e-5)

    # 3) Packed path with grid > 1 and a partial boundary block.
    x3 = jax.random.normal(k5, (1, 160, 32), dtype=jnp.float32)
    out3 = jax.block_until_ready(withbias_layernorm(x3, w, b, block_bytes=8 * 512 * 4))
    ref3 = _reference_layernorm(x3, w, b)
    assert jnp.allclose(out3, ref3, atol=2e-5, rtol=1e-5)

    # 4) bf16 input: exercises 16-row sublane rounding and the f32-temp VMEM budget.
    xb = jax.random.normal(k1, (2, 256, 32), dtype=jnp.float32).astype(jnp.bfloat16)
    outb = jax.block_until_ready(withbias_layernorm(xb, w, b))
    refb = _reference_layernorm(xb, w, b)
    assert jnp.allclose(outb.astype(jnp.float32), refb.astype(jnp.float32),
                        atol=5e-2, rtol=5e-2)

    print("KERNEL_OK")
</pallas_src>

<mosaic_0001>
module attributes {stable_mosaic.version = 11 : i64} {
  func.func @_ln_kernel_packed(%arg0: i32, %arg1: memref<8x512xf32, #tpu.memory_space<vmem>>, %arg2: memref<1x512xf32, #tpu.memory_space<vmem>>, %arg3: memref<1x512xf32, #tpu.memory_space<vmem>>, %arg4: memref<512x16xf32, #tpu.memory_space<vmem>>, %arg5: memref<16x512xf32, #tpu.memory_space<vmem>>, %arg6: memref<8x512xf32, #tpu.memory_space<vmem>>) attributes {dimension_semantics = [#tpu.dimension_semantics<parallel>], iteration_bounds = array<i64: 1>, scalar_prefetch = 0 : i64, scratch_operands = 0 : i64, tpu.core_type = #tpu.core_type<tc>, window_params = [{transform_indices = @transform_0, window_bounds = array<i64: 8, 512>}, {pipeline_mode = #tpu.pipeline_mode<synchronous>, transform_indices = @transform_1, window_bounds = array<i64: 1, 512>}, {pipeline_mode = #tpu.pipeline_mode<synchronous>, transform_indices = @transform_2, window_bounds = array<i64: 1, 512>}, {pipeline_mode = #tpu.pipeline_mode<synchronous>, transform_indices = @transform_3, window_bounds = array<i64: 512, 16>}, {pipeline_mode = #tpu.pipeline_mode<synchronous>, transform_indices = @transform_4, window_bounds = array<i64: 16, 512>}, {transform_indices = @transform_5, window_bounds = array<i64: 8, 512>}]} {
    %c0 = arith.constant 0 : index
    %c0_0 = arith.constant 0 : index
    %0 = vector.load %arg1[%c0, %c0_0] : memref<8x512xf32, #tpu.memory_space<vmem>>, vector<8x512xf32>
    %c0_1 = arith.constant 0 : index
    %c0_2 = arith.constant 0 : index
    %1 = vector.load %arg4[%c0_1, %c0_2] : memref<512x16xf32, #tpu.memory_space<vmem>>, vector<512x16xf32>
    %c0_3 = arith.constant 0 : index
    %c0_4 = arith.constant 0 : index
    %2 = vector.load %arg5[%c0_3, %c0_4] : memref<16x512xf32, #tpu.memory_space<vmem>>, vector<16x512xf32>
    %cst = arith.constant dense<0.000000e+00> : vector<8x16xf32>
    %3 = tpu.matmul %0, %1, %cst {dimension_numbers = #tpu.dot_dimension_numbers<[1], [0], [0], [1], [0, 0, 1, 1], [], []>} : vector<8x512xf32>, vector<512x16xf32>, vector<8x16xf32> -> vector<8x16xf32>
    %cst_5 = arith.constant 3.125000e-02 : f32
    %4 = vector.broadcast %cst_5 : f32 to vector<8x16xf32>
    %5 = arith.mulf %3, %4 : vector<8x16xf32>
    %cst_6 = arith.constant dense<0.000000e+00> : vector<8x512xf32>
    %6 = tpu.matmul %5, %2, %cst_6 {dimension_numbers = #tpu.dot_dimension_numbers<[1], [0], [0], [1], [0, 0, 1, 1], [], []>} : vector<8x16xf32>, vector<16x512xf32>, vector<8x512xf32> -> vector<8x512xf32>
    %7 = arith.subf %0, %6 : vector<8x512xf32>
    %8 = arith.mulf %7, %7 : vector<8x512xf32>
    %cst_7 = arith.constant dense<0.000000e+00> : vector<8x16xf32>
    %9 = tpu.matmul %8, %1, %cst_7 {dimension_numbers = #tpu.dot_dimension_numbers<[1], [0], [0], [1], [0, 0, 1, 1], [], []>} : vector<8x512xf32>, vector<512x16xf32>, vector<8x16xf32> -> vector<8x16xf32>
    %cst_8 = arith.constant 3.125000e-02 : f32
    %10 = vector.broadcast %cst_8 : f32 to vector<8x16xf32>
    %11 = arith.mulf %9, %10 : vector<8x16xf32>
    %cst_9 = arith.constant 9.99999974E-6 : f32
    %12 = vector.broadcast %cst_9 : f32 to vector<8x16xf32>
    %13 = arith.addf %11, %12 : vector<8x16xf32>
    %14 = math.rsqrt %13 : vector<8x16xf32>
    %cst_10 = arith.constant dense<0.000000e+00> : vector<8x512xf32>
    %15 = tpu.matmul %14, %2, %cst_10 {dimension_numbers = #tpu.dot_dimension_numbers<[1], [0], [0], [1], [0, 0, 1, 1], [], []>} : vector<8x16xf32>, vector<16x512xf32>, vector<8x512xf32> -> vector<8x512xf32>
    %c0_11 = arith.constant 0 : index
    %c0_12 = arith.constant 0 : index
    %16 = vector.load %arg2[%c0_11, %c0_12] : memref<1x512xf32, #tpu.memory_space<vmem>>, vector<1x512xf32>
    %c0_13 = arith.constant 0 : index
    %c0_14 = arith.constant 0 : index
    %17 = vector.load %arg3[%c0_13, %c0_14] : memref<1x512xf32, #tpu.memory_space<vmem>>, vector<1x512xf32>
    %18 = arith.mulf %7, %15 : vector<8x512xf32>
    %19 = vector.broadcast %16 : vector<1x512xf32> to vector<8x512xf32>
    %20 = arith.mulf %18, %19 : vector<8x512xf32>
    %21 = vector.broadcast %17 : vector<1x512xf32> to vector<8x512xf32>
    %22 = arith.addf %20, %21 : vector<8x512xf32>
    %c0_15 = arith.constant 0 : index
    %c0_16 = arith.constant 0 : index
    %23 = vector.load %arg6[%c0_15, %c0_16] : memref<8x512xf32, #tpu.memory_space<vmem>>, vector<8x512xf32>
    tpu.vector_store %arg6[%c0_15, %c0_16], %22 {strides = array<i32>} : memref<8x512xf32, #tpu.memory_space<vmem>>, vector<8x512xf32>,
    return
  }
  func.func @transform_0(%arg0: i32) -> (i32, i32) {
    %c0_i32 = arith.constant 0 : i32
    %c0_i32_0 = arith.constant 0 : i32
    return %arg0, %c0_i32 : i32, i32
  }
  func.func @transform_1(%arg0: i32) -> (i32, i32) {
    %c0_i32 = arith.constant 0 : i32
    %c0_i32_0 = arith.constant 0 : i32
    %c0_i32_1 = arith.constant 0 : i32
    return %c0_i32, %c0_i32_0 : i32, i32
  }
  func.func @transform_2(%arg0: i32) -> (i32, i32) {
    %c0_i32 = arith.constant 0 : i32
    %c0_i32_0 = arith.constant 0 : i32
    %c0_i32_1 = arith.constant 0 : i32
    return %c0_i32, %c0_i32_0 : i32, i32
  }
  func.func @transform_3(%arg0: i32) -> (i32, i32) {
    %c0_i32 = arith.constant 0 : i32
    %c0_i32_0 = arith.constant 0 : i32
    %c0_i32_1 = arith.constant 0 : i32
    return %c0_i32, %c0_i32_0 : i32, i32
  }
  func.func @transform_4(%arg0: i32) -> (i32, i32) {
    %c0_i32 = arith.constant 0 : i32
    %c0_i32_0 = arith.constant 0 : i32
    %c0_i32_1 = arith.constant 0 : i32
    return %c0_i32, %c0_i32_0 : i32, i32
  }
  func.func @transform_5(%arg0: i32) -> (i32, i32) {
    %c0_i32 = arith.constant 0 : i32
    %c0_i32_0 = arith.constant 0 : i32
    return %arg0, %c0_i32 : i32, i32
  }
}

</mosaic_0001>

<llo_original>
// kernel: tpu_custom_call.1
$region0: #{tpu_custom_call.1}
  #allocation0 [shape = 'u32[]', space=smem, size = 0x4, offset = 0x4, fixed_abs, tag = 'smem constant byte address 0x4 - core index']
  #allocation1 [shape = 'u32[72,128]{1,0:T(1,128)}', space=vmem, size = 0x9000, scoped, tag = 'internal scratch']
  %s0 = inlined_call_operand.vmem [shape: f32[8,512], index: 0, kind: input, shape index: {}]
  %s1 = inlined_call_operand.vmem [shape: f32[1,512], index: 1, kind: input, shape index: {}]
  %s2 = inlined_call_operand.vmem [shape: f32[1,512], index: 2, kind: input, shape index: {}]
  %s3 = inlined_call_operand.vmem [shape: f32[512,16], index: 3, kind: input, shape index: {}]
  %s4 = inlined_call_operand.vmem [shape: f32[16,512], index: 4, kind: input, shape index: {}]
  %s5 = inlined_call_operand.hbm [shape: f32[8,512], index: 5, kind: output, shape index: {}]
  %s6 = sld [smem:[#allocation0]]
  $region30: #{tpu_custom_call.1} parent=0
    _
  %s8 = ssub.s32 1, %s6
  %s9 = scalar_select 0, %s8, %s6
  $region1: #{tpu_custom_call.1} parent=0
    #allocation2 [shape = 'u8[16384]{0}', space=vmem, size = 0x4000, scoped, tag = 'output window, operand 0, single buffered']
    #allocation3 [shape = 's32[1]{0}', space=sflag, size = 0x4, scoped, tag = 'scoped memory for tpu_custom_call.1']
    %10 = vsyncpa [#allocation3], 0
    // Predicated region
    $region2: #{tpu_custom_call.1} parent=1 // pred_check
      _
    $region3: #{tpu_custom_call.1} parent=1 // pred_check_branch
      %12 = sbr.rel (0) target = $region5
    $region4: #{tpu_custom_call.1} parent=1 // pred_region
      _
    $region5: #{tpu_custom_call.1} parent=1 // pred_fallthru
      _
    // Predicated region
    $region6: #{tpu_custom_call.1} parent=1 // pred_check
      _
    $region7: #{tpu_custom_call.1} parent=1 // pred_check_branch
      %14 = sbr.rel (0) target = $region9
    $region8: #{tpu_custom_call.1} parent=1 // pred_region
      _
    $region9: #{tpu_custom_call.1} parent=1 // pred_fallthru
      _
    // Predicated region
    $region10: #{tpu_custom_call.1} parent=1 // pred_check
      _
    $region11: #{tpu_custom_call.1} parent=1 // pred_check_branch
      %16 = sbr.rel (0) target = $region13
    $region12: #{tpu_custom_call.1} parent=1 // pred_region
      _
    $region13: #{tpu_custom_call.1} parent=1 // pred_fallthru
      _
    // Predicated region
    $region14: #{tpu_custom_call.1} parent=1 // pred_check
      _
    $region15: #{tpu_custom_call.1} parent=1 // pred_check_branch
      %18 = sbr.rel (0) target = $region17
    $region16: #{tpu_custom_call.1} parent=1 // pred_region
      _
    $region17: #{tpu_custom_call.1} parent=1 // pred_fallthru
      _
    // Predicated region
    $region18: #{tpu_custom_call.1} parent=1 // pred_check
      _
    $region19: #{tpu_custom_call.1} parent=1 // pred_check_branch
      %20 = sbr.rel (0) target = $region21
    $region20: #{tpu_custom_call.1} parent=1 // pred_region
      _
    $region21: #{tpu_custom_call.1} parent=1 // pred_fallthru
      _
    %v21 = vld [vmem:[%s0] sm:$0xff]
    %v22 = vld [vmem:[%s0 + $0x8] sm:$0xff]
    %v23 = vld [vmem:[%s0 + $0x10] sm:$0xff]
    %v24 = vld [vmem:[%s0 + $0x18] sm:$0xff]
    %v25 = vld [vmem:[%s3] sm:$0xff]
    %v26 = vld [vmem:[%s3 + $0x8] sm:$0xff]
    %v27 = vld [vmem:[%s3 + $0x10] sm:$0xff]
    %v28 = vld [vmem:[%s3 + $0x18] sm:$0xff]
    %v29 = vld [vmem:[%s3 + $0x20] sm:$0xff]
    %v30 = vld [vmem:[%s3 + $0x28] sm:$0xff]
    %v31 = vld [vmem:[%s3 + $0x30] sm:$0xff]
    %v32 = vld [vmem:[%s3 + $0x38] sm:$0xff]
    %v33 = vld [vmem:[%s3 + $0x40] sm:$0xff]
    %v34 = vld [vmem:[%s3 + $0x48] sm:$0xff]
    %v35 = vld [vmem:[%s3 + $0x50] sm:$0xff]
    %v36 = vld [vmem:[%s3 + $0x58] sm:$0xff]
    %v37 = vld [vmem:[%s3 + $0x60] sm:$0xff]
    %v38 = vld [vmem:[%s3 + $0x68] sm:$0xff]
    %v39 = vld [vmem:[%s3 + $0x70] sm:$0xff]
    %v40 = vld [vmem:[%s3 + $0x78] sm:$0xff]
    %v41 = vld [vmem:[%s3 + $0x80] sm:$0xff]
    %v42 = vld [vmem:[%s3 + $0x88] sm:$0xff]
    %v43 = vld [vmem:[%s3 + $0x90] sm:$0xff]
    %v44 = vld [vmem:[%s3 + $0x98] sm:$0xff]
    %v45 = vld [vmem:[%s3 + $0xa0] sm:$0xff]
    %v46 = vld [vmem:[%s3 + $0xa8] sm:$0xff]
    %v47 = vld [vmem:[%s3 + $0xb0] sm:$0xff]
    %v48 = vld [vmem:[%s3 + $0xb8] sm:$0xff]
    %v49 = vld [vmem:[%s3 + $0xc0] sm:$0xff]
    %v50 = vld [vmem:[%s3 + $0xc8] sm:$0xff]
    %v51 = vld [vmem:[%s3 + $0xd0] sm:$0xff]
    %v52 = vld [vmem:[%s3 + $0xd8] sm:$0xff]
    %v53 = vld [vmem:[%s3 + $0xe0] sm:$0xff]
    %v54 = vld [vmem:[%s3 + $0xe8] sm:$0xff]
    %v55 = vld [vmem:[%s3 + $0xf0] sm:$0xff]
    %v56 = vld [vmem:[%s3 + $0xf8] sm:$0xff]
    %v57 = vld [vmem:[%s3 + $0x100] sm:$0xff]
    %v58 = vld [vmem:[%s3 + $0x108] sm:$0xff]
    %v59 = vld [vmem:[%s3 + $0x110] sm:$0xff]
    %v60 = vld [vmem:[%s3 + $0x118] sm:$0xff]
    %v61 = vld [vmem:[%s3 + $0x120] sm:$0xff]
    %v62 = vld [vmem:[%s3 + $0x128] sm:$0xff]
    %v63 = vld [vmem:[%s3 + $0x130] sm:$0xff]
    %v64 = vld [vmem:[%s3 + $0x138] sm:$0xff]
    %v65 = vld [vmem:[%s3 + $0x140] sm:$0xff]
    %v66 = vld [vmem:[%s3 + $0x148] sm:$0xff]
    %v67 = vld [vmem:[%s3 + $0x150] sm:$0xff]
    %v68 = vld [vmem:[%s3 + $0x158] sm:$0xff]
    %v69 = vld [vmem:[%s3 + $0x160] sm:$0xff]
    %v70 = vld [vmem:[%s3 + $0x168] sm:$0xff]
    %v71 = vld [vmem:[%s3 + $0x170] sm:$0xff]
    %v72 = vld [vmem:[%s3 + $0x178] sm:$0xff]
    %v73 = vld [vmem:[%s3 + $0x180] sm:$0xff]
    %v74 = vld [vmem:[%s3 + $0x188] sm:$0xff]
    %v75 = vld [vmem:[%s3 + $0x190] sm:$0xff]
    %v76 = vld [vmem:[%s3 + $0x198] sm:$0xff]
    %v77 = vld [vmem:[%s3 + $0x1a0] sm:$0xff]
    %v78 = vld [vmem:[%s3 + $0x1a8] sm:$0xff]
    %v79 = vld [vmem:[%s3 + $0x1b0] sm:$0xff]
    %v80 = vld [vmem:[%s3 + $0x1b8] sm:$0xff]
    %v81 = vld [vmem:[%s3 + $0x1c0] sm:$0xff]
    %v82 = vld [vmem:[%s3 + $0x1c8] sm:$0xff]
    %v83 = vld [vmem:[%s3 + $0x1d0] sm:$0xff]
    %v84 = vld [vmem:[%s3 + $0x1d8] sm:$0xff]
    %v85 = vld [vmem:[%s3 + $0x1e0] sm:$0xff]
    %v86 = vld [vmem:[%s3 + $0x1e8] sm:$0xff]
    %v87 = vld [vmem:[%s3 + $0x1f0] sm:$0xff]
    %v88 = vld [vmem:[%s3 + $0x1f8] sm:$0xff]
    %v89 = vld [vmem:[%s4] sm:$0xff]
    %v90 = vld [vmem:[%s4 + $0x8] sm:$0xff]
    %v91 = vld [vmem:[%s4 + $0x10] sm:$0xff]
    %v92 = vld [vmem:[%s4 + $0x18] sm:$0xff]
    %v93 = vld [vmem:[%s4 + $0x20] sm:$0xff]
    %v94 = vld [vmem:[%s4 + $0x28] sm:$0xff]
    %v95 = vld [vmem:[%s4 + $0x30] sm:$0xff]
    %v96 = vld [vmem:[%s4 + $0x38] sm:$0xff]
    %97 = vmatpush.msra.mxu0 %v40
    %98 = vmatpush.msra.mxu0 %v39
    %99 = vmatpush.msra.mxu0 %v38
    %100 = vmatpush.msra.mxu0 %v37
    %101 = vmatpush.msra.mxu0 %v36
    %102 = vmatpush.msra.mxu0 %v35
    %103 = vmatpush.msra.mxu0 %v34
    %104 = vmatpush.msra.mxu0 %v33
    %105 = vmatpush.msra.mxu0 %v32
    %106 = vmatpush.msra.mxu0 %v31
    %107 = vmatpush.msra.mxu0 %v30
    %108 = vmatpush.msra.mxu0 %v29
    %109 = vmatpush.msra.mxu0 %v28
    %110 = vmatpush.msra.mxu0 %v27
    %111 = vmatpush.msra.mxu0 %v26
    %112 = vmatpush.msra.mxu0 %v25
    %113 = vmatmul.f32.gmra.mxu0 %v21
    %v114 = vpop.f32.mrf.mxu0
    %v115 = vadd.f32 0.0, %v114
    %116 = vdwg.mxu0
    %117 = vmatpush.msra.mxu0 %v56
    %118 = vmatpush.msra.mxu0 %v55
    %119 = vmatpush.msra.mxu0 %v54
    %120 = vmatpush.msra.mxu0 %v53
    %121 = vmatpush.msra.mxu0 %v52
    %122 = vmatpush.msra.mxu0 %v51
    %123 = vmatpush.msra.mxu0 %v50
    %124 = vmatpush.msra.mxu0 %v49
    %125 = vmatpush.msra.mxu0 %v48
    %126 = vmatpush.msra.mxu0 %v47
    %127 = vmatpush.msra.mxu0 %v46
    %128 = vmatpush.msra.mxu0 %v45
    %129 = vmatpush.msra.mxu0 %v44
    %130 = vmatpush.msra.mxu0 %v43
    %131 = vmatpush.msra.mxu0 %v42
    %132 = vmatpush.msra.mxu0 %v41
    %133 = vmatmul.f32.gmra.mxu0 %v22
    %v134 = vpop.f32.mrf.mxu0
    %v135 = vadd.f32 %v115, %v134
    %136 = vdwg.mxu0
    %137 = vmatpush.msra.mxu0 %v72
    %138 = vmatpush.msra.mxu0 %v71
    %139 = vmatpush.msra.mxu0 %v70
    %140 = vmatpush.msra.mxu0 %v69
    %141 = vmatpush.msra.mxu0 %v68
    %142 = vmatpush.msra.mxu0 %v67
    %143 = vmatpush.msra.mxu0 %v66
    %144 = vmatpush.msra.mxu0 %v65
    %145 = vmatpush.msra.mxu0 %v64
    %146 = vmatpush.msra.mxu0 %v63
    %147 = vmatpush.msra.mxu0 %v62
    %148 = vmatpush.msra.mxu0 %v61
    %149 = vmatpush.msra.mxu0 %v60
    %150 = vmatpush.msra.mxu0 %v59
    %151 = vmatpush.msra.mxu0 %v58
    %152 = vmatpush.msra.mxu0 %v57
    %153 = vmatmul.f32.gmra.mxu0 %v23
    %v154 = vpop.f32.mrf.mxu0
    %v155 = vadd.f32 %v135, %v154
    %156 = vdwg.mxu0
    %157 = vmatpush.msra.mxu0 %v88
    %158 = vmatpush.msra.mxu0 %v87
    %159 = vmatpush.msra.mxu0 %v86
    %160 = vmatpush.msra.mxu0 %v85
    %161 = vmatpush.msra.mxu0 %v84
    %162 = vmatpush.msra.mxu0 %v83
    %163 = vmatpush.msra.mxu0 %v82
    %164 = vmatpush.msra.mxu0 %v81
    %165 = vmatpush.msra.mxu0 %v80
    %166 = vmatpush.msra.mxu0 %v79
    %167 = vmatpush.msra.mxu0 %v78
    %168 = vmatpush.msra.mxu0 %v77
    %169 = vmatpush.msra.mxu0 %v76
    %170 = vmatpush.msra.mxu0 %v75
    %171 = vmatpush.msra.mxu0 %v74
    %172 = vmatpush.msra.mxu0 %v73
    %173 = vmatmul.f32.gmra.mxu0 %v24
    %v174 = vpop.f32.mrf.mxu0
    %v175 = vadd.f32 %v155, %v174
    %176 = vdwg.mxu0
    %v177 = vmul.f32 %v175, 0.03125
    %vm178 = vcmask 130048
    %v180 = vsel %vm178, %v177, 0
    %182 = vmatpush.msra.mxu0 0.0
    %183 = vmatpush.msra.mxu0 0.0
    %184 = vmatpush.msra.mxu0 0.0
    %185 = vmatpush.msra.mxu0 0.0
    %186 = vmatpush.msra.mxu0 0.0
    %187 = vmatpush.msra.mxu0 0.0
    %188 = vmatpush.msra.mxu0 0.0
    %189 = vmatpush.msra.mxu0 0.0
    %190 = vmatpush.msra.mxu0 0.0
    %191 = vmatpush.msra.mxu0 0.0
    %192 = vmatpush.msra.mxu0 0.0
    %193 = vmatpush.msra.mxu0 0.0
    %194 = vmatpush.msra.mxu0 0.0
    %195 = vmatpush.msra.mxu0 0.0
    %196 = vmatpush.msra.mxu0 %v93
    %197 = vmatpush.msra.mxu0 %v89
    %198 = vmatmul.f32.gmra.mxu0 %v180
    %v199 = vpop.f32.mrf.mxu0
    %v200 = vadd.f32 0.0, %v199
    %201 = vdwg.mxu0
    %202 = vmatpush.msra.mxu0 0.0
    %203 = vmatpush.msra.mxu0 0.0
    %204 = vmatpush.msra.mxu0 0.0
    %205 = vmatpush.msra.mxu0 0.0
    %206 = vmatpush.msra.mxu0 0.0
    %207 = vmatpush.msra.mxu0 0.0
    %208 = vmatpush.msra.mxu0 0.0
    %209 = vmatpush.msra.mxu0 0.0
    %210 = vmatpush.msra.mxu0 0.0
    %211 = vmatpush.msra.mxu0 0.0
    %212 = vmatpush.msra.mxu0 0.0
    %213 = vmatpush.msra.mxu0 0.0
    %214 = vmatpush.msra.mxu0 0.0
    %215 = vmatpush.msra.mxu0 0.0
    %216 = vmatpush.msra.mxu0 %v94
    %217 = vmatpush.msra.mxu0 %v90
    %218 = vmatmul.f32.gmra.mxu0 %v180
    %v219 = vpop.f32.mrf.mxu0
    %v220 = vadd.f32 0.0, %v219
    %221 = vdwg.mxu0
    %222 = vmatpush.msra.mxu0 0.0
    %223 = vmatpush.msra.mxu0 0.0
    %224 = vmatpush.msra.mxu0 0.0
    %225 = vmatpush.msra.mxu0 0.0
    %226 = vmatpush.msra.mxu0 0.0
    %227 = vmatpush.msra.mxu0 0.0
    %228 = vmatpush.msra.mxu0 0.0
    %229 = vmatpush.msra.mxu0 0.0
    %230 = vmatpush.msra.mxu0 0.0
    %231 = vmatpush.msra.mxu0 0.0
    %232 = vmatpush.msra.mxu0 0.0
    %233 = vmatpush.msra.mxu0 0.0
    %234 = vmatpush.msra.mxu0 0.0
    %235 = vmatpush.msra.mxu0 0.0
    %236 = vmatpush.msra.mxu0 %v95
    %237 = vmatpush.msra.mxu0 %v91
    %238 = vmatmul.f32.gmra.mxu0 %v180
    %v239 = vpop.f32.mrf.mxu0
    %v240 = vadd.f32 0.0, %v239
    %241 = vdwg.mxu0
    %242 = vmatpush.msra.mxu0 0.0
    %243 = vmatpush.msra.mxu0 0.0
    %244 = vmatpush.msra.mxu0 0.0
    %245 = vmatpush.msra.mxu0 0.0
    %246 = vmatpush.msra.mxu0 0.0
    %247 = vmatpush.msra.mxu0 0.0
    %248 = vmatpush.msra.mxu0 0.0
    %249 = vmatpush.msra.mxu0 0.0
    %250 = vmatpush.msra.mxu0 0.0
    %251 = vmatpush.msra.mxu0 0.0
    %252 = vmatpush.msra.mxu0 0.0
    %253 = vmatpush.msra.mxu0 0.0
    %254 = vmatpush.msra.mxu0 0.0
    %255 = vmatpush.msra.mxu0 0.0
    %256 = vmatpush.msra.mxu0 %v96
    %257 = vmatpush.msra.mxu0 %v92
    %258 = vmatmul.f32.gmra.mxu0 %v180
    %v259 = vpop.f32.mrf.mxu0
    %v260 = vadd.f32 0.0, %v259
    %261 = vdwg.mxu0
    %v262 = vsub.f32 %v21, %v200
    %v263 = vsub.f32 %v22, %v220
    %v264 = vsub.f32 %v23, %v240
    %v265 = vsub.f32 %v24, %v260
    %v266 = vmul.f32 %v262, %v262
    %v267 = vmul.f32 %v263, %v263
    %v268 = vmul.f32 %v264, %v264
    %v269 = vmul.f32 %v265, %v265
    %270 = vmatpush.msra.mxu0 %v40
    %271 = vmatpush.msra.mxu0 %v39
    %272 = vmatpush.msra.mxu0 %v38
    %273 = vmatpush.msra.mxu0 %v37
    %274 = vmatpush.msra.mxu0 %v36
    %275 = vmatpush.msra.mxu0 %v35
    %276 = vmatpush.msra.mxu0 %v34
    %277 = vmatpush.msra.mxu0 %v33
    %278 = vmatpush.msra.mxu0 %v32
    %279 = vmatpush.msra.mxu0 %v31
    %280 = vmatpush.msra.mxu0 %v30
    %281 = vmatpush.msra.mxu0 %v29
    %282 = vmatpush.msra.mxu0 %v28
    %283 = vmatpush.msra.mxu0 %v27
    %284 = vmatpush.msra.mxu0 %v26
    %285 = vmatpush.msra.mxu0 %v25
    %286 = vmatmul.f32.gmra.mxu0 %v266
    %v287 = vpop.f32.mrf.mxu0
    %v288 = vadd.f32 0.0, %v287
    %289 = vdwg.mxu0
    %290 = vmatpush.msra.mxu0 %v56
    %291 = vmatpush.msra.mxu0 %v55
    %292 = vmatpush.msra.mxu0 %v54
    %293 = vmatpush.msra.mxu0 %v53
    %294 = vmatpush.msra.mxu0 %v52
    %295 = vmatpush.msra.mxu0 %v51
    %296 = vmatpush.msra.mxu0 %v50
    %297 = vmatpush.msra.mxu0 %v49
    %298 = vmatpush.msra.mxu0 %v48
    %299 = vmatpush.msra.mxu0 %v47
    %300 = vmatpush.msra.mxu0 %v46
    %301 = vmatpush.msra.mxu0 %v45
    %302 = vmatpush.msra.mxu0 %v44
    %303 = vmatpush.msra.mxu0 %v43
    %304 = vmatpush.msra.mxu0 %v42
    %305 = vmatpush.msra.mxu0 %v41
    %306 = vmatmul.f32.gmra.mxu0 %v267
    %v307 = vpop.f32.mrf.mxu0
    %v308 = vadd.f32 %v288, %v307
    %309 = vdwg.mxu0
    %310 = vmatpush.msra.mxu0 %v72
    %311 = vmatpush.msra.mxu0 %v71
    %312 = vmatpush.msra.mxu0 %v70
    %313 = vmatpush.msra.mxu0 %v69
    %314 = vmatpush.msra.mxu0 %v68
    %315 = vmatpush.msra.mxu0 %v67
    %316 = vmatpush.msra.mxu0 %v66
    %317 = vmatpush.msra.mxu0 %v65
    %318 = vmatpush.msra.mxu0 %v64
    %319 = vmatpush.msra.mxu0 %v63
    %320 = vmatpush.msra.mxu0 %v62
    %321 = vmatpush.msra.mxu0 %v61
    %322 = vmatpush.msra.mxu0 %v60
    %323 = vmatpush.msra.mxu0 %v59
    %324 = vmatpush.msra.mxu0 %v58
    %325 = vmatpush.msra.mxu0 %v57
    %326 = vmatmul.f32.gmra.mxu0 %v268
    %v327 = vpop.f32.mrf.mxu0
    %v328 = vadd.f32 %v308, %v327
    %329 = vdwg.mxu0
    %330 = vmatpush.msra.mxu0 %v88
    %331 = vmatpush.msra.mxu0 %v87
    %332 = vmatpush.msra.mxu0 %v86
    %333 = vmatpush.msra.mxu0 %v85
    %334 = vmatpush.msra.mxu0 %v84
    %335 = vmatpush.msra.mxu0 %v83
    %336 = vmatpush.msra.mxu0 %v82
    %337 = vmatpush.msra.mxu0 %v81
    %338 = vmatpush.msra.mxu0 %v80
    %339 = vmatpush.msra.mxu0 %v79
    %340 = vmatpush.msra.mxu0 %v78
    %341 = vmatpush.msra.mxu0 %v77
    %342 = vmatpush.msra.mxu0 %v76
    %343 = vmatpush.msra.mxu0 %v75
    %344 = vmatpush.msra.mxu0 %v74
    %345 = vmatpush.msra.mxu0 %v73
    %346 = vmatmul.f32.gmra.mxu0 %v269
    %v347 = vpop.f32.mrf.mxu0
    %v348 = vadd.f32 %v328, %v347
    %349 = vdwg.mxu0
    %v350 = vmul.f32 %v348, 0.03125
    %v351 = vadd.f32 %v350, 1e-05
    %v352 = vrsqrt.pop %v351
    %v353 = vmul.f32 %v352, %v351
    %v354 = vmul.f32 %v353, %v352
    %v355 = vmul.f32 0.5, %v354
    %v356 = vsub.f32 1.5, %v355
    %v357 = vmul.f32 %v352, %v356
    %vm358 = vweird.f32 %v351
    %vm359 = vweird.f32 %v352
    %vm360 = vmor %vm358, %vm359
    %v361 = vsel %vm360, %v352, %v357
    %v363 = vsel %vm178, %v361, 0
    %365 = vmatpush.msra.mxu0 0.0
    %366 = vmatpush.msra.mxu0 0.0
    %367 = vmatpush.msra.mxu0 0.0
    %368 = vmatpush.msra.mxu0 0.0
    %369 = vmatpush.msra.mxu0 0.0
    %370 = vmatpush.msra.mxu0 0.0
    %371 = vmatpush.msra.mxu0 0.0
    %372 = vmatpush.msra.mxu0 0.0
    %373 = vmatpush.msra.mxu0 0.0
    %374 = vmatpush.msra.mxu0 0.0
    %375 = vmatpush.msra.mxu0 0.0
    %376 = vmatpush.msra.mxu0 0.0
    %377 = vmatpush.msra.mxu0 0.0
    %378 = vmatpush.msra.mxu0 0.0
    %379 = vmatpush.msra.mxu0 %v93
    %380 = vmatpush.msra.mxu0 %v89
    %381 = vmatmul.f32.gmra.mxu0 %v363
    %v382 = vpop.f32.mrf.mxu0
    %v383 = vadd.f32 0.0, %v382
    %384 = vdwg.mxu0
    %385 = vmatpush.msra.mxu0 0.0
    %386 = vmatpush.msra.mxu0 0.0
    %387 = vmatpush.msra.mxu0 0.0
    %388 = vmatpush.msra.mxu0 0.0
    %389 = vmatpush.msra.mxu0 0.0
    %390 = vmatpush.msra.mxu0 0.0
    %391 = vmatpush.msra.mxu0 0.0
    %392 = vmatpush.msra.mxu0 0.0
    %393 = vmatpush.msra.mxu0 0.0
    %394 = vmatpush.msra.mxu0 0.0
    %395 = vmatpush.msra.mxu0 0.0
    %396 = vmatpush.msra.mxu0 0.0
    %397 = vmatpush.msra.mxu0 0.0
    %398 = vmatpush.msra.mxu0 0.0
    %399 = vmatpush.msra.mxu0 %v94
    %400 = vmatpush.msra.mxu0 %v90
    %401 = vmatmul.f32.gmra.mxu0 %v363
    %v402 = vpop.f32.mrf.mxu0
    %v403 = vadd.f32 0.0, %v402
    %404 = vdwg.mxu0
    %405 = vmatpush.msra.mxu0 0.0
    %406 = vmatpush.msra.mxu0 0.0
    %407 = vmatpush.msra.mxu0 0.0
    %408 = vmatpush.msra.mxu0 0.0
    %409 = vmatpush.msra.mxu0 0.0
    %410 = vmatpush.msra.mxu0 0.0
    %411 = vmatpush.msra.mxu0 0.0
    %412 = vmatpush.msra.mxu0 0.0
    %413 = vmatpush.msra.mxu0 0.0
    %414 = vmatpush.msra.mxu0 0.0
    %415 = vmatpush.msra.mxu0 0.0
    %416 = vmatpush.msra.mxu0 0.0
    %417 = vmatpush.msra.mxu0 0.0
    %418 = vmatpush.msra.mxu0 0.0
    %419 = vmatpush.msra.mxu0 %v95
    %420 = vmatpush.msra.mxu0 %v91
    %421 = vmatmul.f32.gmra.mxu0 %v363
    %v422 = vpop.f32.mrf.mxu0
    %v423 = vadd.f32 0.0, %v422
    %424 = vdwg.mxu0
    %425 = vmatpush.msra.mxu0 0.0
    %426 = vmatpush.msra.mxu0 0.0
    %427 = vmatpush.msra.mxu0 0.0
    %428 = vmatpush.msra.mxu0 0.0
    %429 = vmatpush.msra.mxu0 0.0
    %430 = vmatpush.msra.mxu0 0.0
    %431 = vmatpush.msra.mxu0 0.0
    %432 = vmatpush.msra.mxu0 0.0
    %433 = vmatpush.msra.mxu0 0.0
    %434 = vmatpush.msra.mxu0 0.0
    %435 = vmatpush.msra.mxu0 0.0
    %436 = vmatpush.msra.mxu0 0.0
    %437 = vmatpush.msra.mxu0 0.0
    %438 = vmatpush.msra.mxu0 0.0
    %439 = vmatpush.msra.mxu0 %v96
    %440 = vmatpush.msra.mxu0 %v92
    %441 = vmatmul.f32.gmra.mxu0 %v363
    %v442 = vpop.f32.mrf.mxu0
    %v443 = vadd.f32 0.0, %v442
    %444 = vdwg.mxu0
    %v445 = vld [vmem:[%s1] sm:$0xf]
    %v446 = vld [vmem:[%s2] sm:$0xf]
    %v447 = vmul.f32 %v262, %v383
    %v448 = vmul.f32 %v263, %v403
    %v449 = vmul.f32 %v264, %v423
    %v450 = vmul.f32 %v265, %v443
    %v452 = vperm.slane %v445, 0
    %v453 = vperm.slane %v445, 1
    %v454 = vperm.slane %v445, 2
    %v455 = vperm.slane %v445, 3
    %v460 = vmul.f32 %v447, %v452
    %v461 = vmul.f32 %v448, %v453
    %v462 = vmul.f32 %v449, %v454
    %v463 = vmul.f32 %v450, %v455
    %v465 = vperm.slane %v446, 0
    %v466 = vperm.slane %v446, 1
    %v467 = vperm.slane %v446, 2
    %v468 = vperm.slane %v446, 3
    %v473 = vadd.f32 %v460, %v465
    %v474 = vadd.f32 %v461, %v466
    %v475 = vadd.f32 %v462, %v467
    %v476 = vadd.f32 %v463, %v468
    %477 = vst [vmem:[#allocation2] sm:$0xff] %v473
    %478 = vst [vmem:[#allocation2 + $0x8] sm:$0xff] %v474
    %479 = vst [vmem:[#allocation2 + $0x10] sm:$0xff] %v475
    %480 = vst [vmem:[#allocation2 + $0x18] sm:$0xff] %v476
    // Predicated region
    $region22: #{tpu_custom_call.1} parent=1 // pred_check
      _
    $region23: #{tpu_custom_call.1} parent=1 // pred_check_branch
      %482 = sbr.rel (0) target = $region25
    $region24: #{tpu_custom_call.1} parent=1 // pred_region
      %484 = vsyncadd [#allocation3], 0
      %s486 = sshll.u32 [#allocation2], 4
      %s487 = int_to_ptr.vmem [resolvable:$true] %s486
      %s488 = sshll.u32 %s5, 4
      %s489 = int_to_ptr.hbm [resolvable:$true] %s488
      %491 = dma.vmem_to_hbm [thread:$0]  %s487, 512, %s489, [#allocation3]
    $region25: #{tpu_custom_call.1} parent=1 // pred_fallthru
      _
    // Predicated region
    $region26: #{tpu_custom_call.1} parent=1 // pred_check
      _
    $region27: #{tpu_custom_call.1} parent=1 // pred_check_branch
      %493 = sbr.rel (0) target = $region29
    $region28: #{tpu_custom_call.1} parent=1 // pred_region
      %495 = dma.done [#allocation3], 512
    $region29: #{tpu_custom_call.1} parent=1 // pred_fallthru
      _
    %496 = vsyncpa [#allocation3], 1

</llo_original>
